<compile_context>
chip_gen: v7x
topology: tpu7x:2x2x1
jax: 0.10.0
libtpu: 0.0.40
codegen_flags: <defaults>
</compile_context>

<pallas_src>
import jax
import jax.numpy as jnp
from jax.experimental import pallas as pl
from jax.experimental.pallas import tpu as pltpu


def _round_up(x, m):
    return ((x + m - 1) // m) * m


def _choose_hidden_tile(hid_p, block_h):
    """Largest multiple of 128 that divides hid_p and is <= block_h."""
    target = max(128, _round_up(block_h, 128))
    if hid_p <= target:
        return hid_p
    best = hid_p
    d = 128
    while d <= target:
        if hid_p % d == 0:
            best = d
        d += 128
    return best


def _spec(shape, index_map, mode=None):
    if mode is None:
        return pl.BlockSpec(shape, index_map)
    return pl.BlockSpec(shape, index_map, pipeline_mode=mode)


def mlp_kernel(x_ref, w1_ref, b1_ref, w2_ref, b2_ref, o_ref, acc_ref):
    """One (batch-tile, hidden-tile) grid step of fc2(relu(fc1(x)))."""
    k = pl.program_id(1)

    @pl.when(k == 0)
    def _():
        acc_ref[...] = jnp.zeros_like(acc_ref)

    # fc1 partial: x @ W1t[:, k-block].  Weights are pre-transposed to (K, N)
    # so the MXU gets a canonical RHS (no per-iteration cross-lane transpose).
    x = x_ref[...].astype(w1_ref.dtype)            # in-kernel cast, no HBM copy
    h = jnp.dot(x, w1_ref[...], preferred_element_type=jnp.float32)
    h = jnp.maximum(h + b1_ref[...], 0.0)          # bias + ReLU in f32 (VPU)

    # fc2 partial: accumulate h_k @ W2t[k-block, :] into the f32 accumulator.
    acc_ref[...] += jnp.dot(h.astype(w2_ref.dtype), w2_ref[...],
                            preferred_element_type=jnp.float32)

    @pl.when(k == pl.num_programs(1) - 1)
    def _():
        o_ref[...] = (acc_ref[...] + b2_ref[...]).astype(o_ref.dtype)


def prepare_params(w1, b1, w2, b2, *, lane_multiple=128,
                   compute_dtype=jnp.bfloat16):
    """One-time weight formatting (pad + cast + transpose), hoisted off the
    per-forward hot path.  lane_multiple=256 fills the 256-wide v6e/v7x MXU;
    128 is already full width on v5e.

    w1: (hidden, in)  -> w1t: (in, HID_pad)      (canonical (K, N) for MXU)
    w2: (out, hidden) -> w2t: (HID_pad, OUT_pad)
    """
    hid_dim, in_dim = w1.shape
    out_dim = w2.shape[0]
    hid_p = _round_up(hid_dim, lane_multiple)
    out_p = _round_up(out_dim, lane_multiple)

    w1t = jnp.pad(w1.T, ((0, 0), (0, hid_p - hid_dim))).astype(compute_dtype)
    w2t = jnp.pad(w2.T, ((0, hid_p - hid_dim),
                         (0, out_p - out_dim))).astype(compute_dtype)
    b1p = jnp.pad(b1, (0, hid_p - hid_dim)).reshape(1, hid_p).astype(jnp.float32)
    b2p = jnp.pad(b2, (0, out_p - out_dim)).reshape(1, out_p).astype(jnp.float32)
    return w1t, b1p, w2t, b2p


def mynn_forward_prepared(x, w1t, b1p, w2t, b2p, *, block_b=256, block_h=512,
                          out_dtype=jnp.float32):
    """Fused fc1->relu->fc2 on pre-formatted params.  Returns (BP, OUT_pad)."""
    B, in_dim = x.shape
    in_dim_w, hid_p = w1t.shape
    hid_p2, out_p = w2t.shape
    assert in_dim_w == in_dim and hid_p2 == hid_p

    # ---- batch tile (sublane rule + >=2 tiles for v7x dual-TC sharding) ----
    block_b = max(8, _round_up(block_b, 8))
    if B > 8:
        block_b = min(block_b, _round_up(-(-B // 2), 8))
    tm = min(block_b, _round_up(B, 8))
    bp = _round_up(B, tm)

    # ---- hidden tile (bounds per-step weight VMEM) -------------------------
    th = _choose_hidden_tile(hid_p, block_h)
    num_i, num_k = bp // tm, hid_p // th

    xp = x if bp == B else jnp.pad(x, ((0, bp - B), (0, 0)))

    # Single-buffer operands whose block index never changes over the grid.
    w_mode = pl.Buffered(1) if num_k == 1 else None   # None -> default (2)
    const_mode = pl.Buffered(1)

    # ---- explicit VMEM budget ----------------------------------------------
    xb = xp.dtype.itemsize
    wb = w1t.dtype.itemsize
    ob = jnp.dtype(out_dtype).itemsize
    wbuf = 1 if num_k == 1 else 2
    vmem_bytes = (2 * tm * in_dim * xb           # x tiles (double-buffered)
                  + wbuf * in_dim * th * wb      # W1 tiles
                  + wbuf * th * 4                # b1 tiles (f32)
                  + wbuf * th * out_p * wb       # W2 tiles
                  + out_p * 4                    # b2 (single buffer)
                  + 2 * tm * out_p * ob          # out tiles
                  + tm * out_p * 4)              # f32 accumulator scratch
    vmem_limit = int(min(max(2 * vmem_bytes + (1 << 20), 32 << 20), 64 << 20))

    cost = pl.CostEstimate(
        flops=2 * bp * (in_dim * hid_p + hid_p * out_p),
        transcendentals=0,
        bytes_accessed=(bp * in_dim * xb + in_dim * hid_p * wb
                        + hid_p * out_p * wb + (hid_p + out_p) * 4
                        + bp * out_p * ob),
    )

    return pl.pallas_call(
        mlp_kernel,
        out_shape=jax.ShapeDtypeStruct((bp, out_p), out_dtype),
        grid_spec=pltpu.PrefetchScalarGridSpec(
            num_scalar_prefetch=0,
            grid=(num_i, num_k),
            in_specs=[
                _spec((tm, in_dim), lambda i, k: (i, 0)),              # x tile
                _spec((in_dim, th), lambda i, k: (0, k), w_mode),      # W1t
                _spec((1, th),      lambda i, k: (0, k), w_mode),      # b1
                _spec((th, out_p),  lambda i, k: (k, 0), w_mode),      # W2t
                _spec((1, out_p),   lambda i, k: (0, 0), const_mode),  # b2
            ],
            out_specs=pl.BlockSpec((tm, out_p), lambda i, k: (i, 0)),
            scratch_shapes=[pltpu.VMEM((tm, out_p), jnp.float32)],
        ),
        compiler_params=pltpu.CompilerParams(
            dimension_semantics=("parallel", "arbitrary"),
            vmem_limit_bytes=vmem_limit,
        ),
        cost_estimate=cost,
    )(xp, w1t, b1p, w2t, b2p)


def mynn_forward(x, w1, b1, w2, b2, *, block_b=256, block_h=512,
                 lane_multiple=128, compute_dtype=jnp.bfloat16,
                 out_dtype=jnp.float32):
    """Convenience wrapper (formats weights per call).  For repeated forwards,
    call prepare_params() once and reuse mynn_forward_prepared()."""
    B = x.shape[0]
    out_dim = w2.shape[0]
    params = prepare_params(w1, b1, w2, b2, lane_multiple=lane_multiple,
                            compute_dtype=compute_dtype)
    out = mynn_forward_prepared(x, *params, block_b=block_b, block_h=block_h,
                                out_dtype=out_dtype)
    return out[:B, :out_dim].astype(jnp.float32)


def init_linear_params(key, in_features, out_features):
    """Deterministic init mimicking torch.nn.Linear default U(-k, k), k=1/sqrt(fan_in)."""
    kw, kb = jax.random.split(key)
    bound = 1.0 / (in_features ** 0.5)
    w = jax.random.uniform(kw, (out_features, in_features),
                           minval=-bound, maxval=bound, dtype=jnp.float32)
    b = jax.random.uniform(kb, (out_features,),
                           minval=-bound, maxval=bound, dtype=jnp.float32)
    return w, b


if __name__ == "__main__":
    input_dim, hidden_dim, output_dim = 16, 32, 4
    batch = 8

    key = jax.random.PRNGKey(0)
    kx, k1, k2 = jax.random.split(key, 3)

    x = jax.random.normal(kx, (batch, input_dim), dtype=jnp.float32)
    w1, b1 = init_linear_params(k1, input_dim, hidden_dim)
    w2, b2 = init_linear_params(k2, hidden_dim, output_dim)

    # Reference in plain JAX (same semantics as the PyTorch module), f32.
    ref = jnp.maximum(x @ w1.T + b1, 0.0) @ w2.T + b2

    # Default bf16-compute path (f32 accumulation) -> loosened tolerance.
    out = mynn_forward(x, w1, b1, w2, b2)
    jax.block_until_ready(out)
    assert out.shape == (batch, output_dim)
    assert jnp.allclose(out, ref, atol=5e-2, rtol=5e-2), \
        f"max abs diff {jnp.max(jnp.abs(out - ref))}"

    # Exact-f32 path should match the f32 reference tightly.
    out_f32 = mynn_forward(x, w1, b1, w2, b2, compute_dtype=jnp.float32)
    jax.block_until_ready(out_f32)
    assert jnp.allclose(out_f32, ref, atol=1e-5, rtol=1e-5), \
        f"max abs diff {jnp.max(jnp.abs(out_f32 - ref))}"

    print("KERNEL_OK")
</pallas_src>

<mosaic_0001>
module attributes {stable_mosaic.version = 11 : i64} {
  func.func @mlp_kernel(%arg0: i32, %arg1: i32, %arg2: memref<8x16xf32, #tpu.memory_space<vmem>>, %arg3: memref<16x128xbf16, #tpu.memory_space<vmem>>, %arg4: memref<1x128xf32, #tpu.memory_space<vmem>>, %arg5: memref<128x128xbf16, #tpu.memory_space<vmem>>, %arg6: memref<1x128xf32, #tpu.memory_space<vmem>>, %arg7: memref<8x128xf32, #tpu.memory_space<vmem>>, %arg8: memref<8x128xf32, #tpu.memory_space<vmem>>) attributes {dimension_semantics = [#tpu.dimension_semantics<parallel>, #tpu.dimension_semantics<arbitrary>], iteration_bounds = array<i64: 1, 1>, scalar_prefetch = 0 : i64, scratch_operands = 1 : i64, tpu.core_type = #tpu.core_type<tc>, window_params = [{transform_indices = @transform_0, window_bounds = array<i64: 8, 16>}, {pipeline_mode = #tpu.pipeline_mode<synchronous>, transform_indices = @transform_1, window_bounds = array<i64: 16, 128>}, {pipeline_mode = #tpu.pipeline_mode<synchronous>, transform_indices = @transform_2, window_bounds = array<i64: 1, 128>}, {pipeline_mode = #tpu.pipeline_mode<synchronous>, transform_indices = @transform_3, window_bounds = array<i64: 128, 128>}, {pipeline_mode = #tpu.pipeline_mode<synchronous>, transform_indices = @transform_4, window_bounds = array<i64: 1, 128>}, {transform_indices = @transform_5, window_bounds = array<i64: 8, 128>}]} {
    %c0_i32 = arith.constant 0 : i32
    %0 = arith.cmpi eq, %arg1, %c0_i32 : i32
    %1 = arith.extui %0 : i1 to i32
    %c0_i32_0 = arith.constant 0 : i32
    %2 = arith.cmpi ne, %1, %c0_i32_0 : i32
    scf.if %2 {
      %cst_16 = arith.constant 0.000000e+00 : f32
      %21 = vector.broadcast %cst_16 : f32 to vector<8x128xf32>
      %c0_17 = arith.constant 0 : index
      %c0_18 = arith.constant 0 : index
      %22 = vector.load %arg8[%c0_17, %c0_18] : memref<8x128xf32, #tpu.memory_space<vmem>>, vector<8x128xf32>
      tpu.vector_store %arg8[%c0_17, %c0_18], %21 {strides = array<i32>} : memref<8x128xf32, #tpu.memory_space<vmem>>, vector<8x128xf32>,
    } else {
    }
    %c0 = arith.constant 0 : index
    %c0_1 = arith.constant 0 : index
    %3 = vector.load %arg2[%c0, %c0_1] : memref<8x16xf32, #tpu.memory_space<vmem>>, vector<8x16xf32>
    %4 = arith.truncf %3 : vector<8x16xf32> to vector<8x16xbf16>
    %c0_2 = arith.constant 0 : index
    %c0_3 = arith.constant 0 : index
    %5 = vector.load %arg3[%c0_2, %c0_3] : memref<16x128xbf16, #tpu.memory_space<vmem>>, vector<16x128xbf16>
    %cst = arith.constant dense<0.000000e+00> : vector<8x128xf32>
    %6 = tpu.matmul %4, %5, %cst {dimension_numbers = #tpu.dot_dimension_numbers<[1], [0], [0], [1], [0, 0, 1, 1], [], []>} : vector<8x16xbf16>, vector<16x128xbf16>, vector<8x128xf32> -> vector<8x128xf32>
    %c0_4 = arith.constant 0 : index
    %c0_5 = arith.constant 0 : index
    %7 = vector.load %arg4[%c0_4, %c0_5] : memref<1x128xf32, #tpu.memory_space<vmem>>, vector<1x128xf32>
    %8 = vector.broadcast %7 : vector<1x128xf32> to vector<8x128xf32>
    %9 = arith.addf %6, %8 : vector<8x128xf32>
    %cst_6 = arith.constant 0.000000e+00 : f32
    %10 = vector.broadcast %cst_6 : f32 to vector<8x128xf32>
    %11 = arith.maximumf %9, %10 : vector<8x128xf32>
    %c0_7 = arith.constant 0 : index
    %c0_8 = arith.constant 0 : index
    %12 = vector.load %arg8[%c0_7, %c0_8] : memref<8x128xf32, #tpu.memory_space<vmem>>, vector<8x128xf32>
    %13 = arith.truncf %11 : vector<8x128xf32> to vector<8x128xbf16>
    %c0_9 = arith.constant 0 : index
    %c0_10 = arith.constant 0 : index
    %14 = vector.load %arg5[%c0_9, %c0_10] : memref<128x128xbf16, #tpu.memory_space<vmem>>, vector<128x128xbf16>
    %cst_11 = arith.constant dense<0.000000e+00> : vector<8x128xf32>
    %15 = tpu.matmul %13, %14, %cst_11 {dimension_numbers = #tpu.dot_dimension_numbers<[1], [0], [0], [1], [0, 0, 1, 1], [], []>} : vector<8x128xbf16>, vector<128x128xbf16>, vector<8x128xf32> -> vector<8x128xf32>
    %16 = arith.addf %12, %15 : vector<8x128xf32>
    %c0_12 = arith.constant 0 : index
    %c0_13 = arith.constant 0 : index
    %17 = vector.load %arg8[%c0_12, %c0_13] : memref<8x128xf32, #tpu.memory_space<vmem>>, vector<8x128xf32>
    tpu.vector_store %arg8[%c0_12, %c0_13], %16 {strides = array<i32>} : memref<8x128xf32, #tpu.memory_space<vmem>>, vector<8x128xf32>,
    %c0_i32_14 = arith.constant 0 : i32
    %18 = arith.cmpi eq, %arg1, %c0_i32_14 : i32
    %19 = arith.extui %18 : i1 to i32
    %c0_i32_15 = arith.constant 0 : i32
    %20 = arith.cmpi ne, %19, %c0_i32_15 : i32
    scf.if %20 {
      %c0_16 = arith.constant 0 : index
      %c0_17 = arith.constant 0 : index
      %21 = vector.load %arg8[%c0_16, %c0_17] : memref<8x128xf32, #tpu.memory_space<vmem>>, vector<8x128xf32>
      %c0_18 = arith.constant 0 : index
      %c0_19 = arith.constant 0 : index
      %22 = vector.load %arg6[%c0_18, %c0_19] : memref<1x128xf32, #tpu.memory_space<vmem>>, vector<1x128xf32>
      %23 = vector.broadcast %22 : vector<1x128xf32> to vector<8x128xf32>
      %24 = arith.addf %21, %23 : vector<8x128xf32>
      %c0_20 = arith.constant 0 : index
      %c0_21 = arith.constant 0 : index
      %25 = vector.load %arg7[%c0_20, %c0_21] : memref<8x128xf32, #tpu.memory_space<vmem>>, vector<8x128xf32>
      tpu.vector_store %arg7[%c0_20, %c0_21], %24 {strides = array<i32>} : memref<8x128xf32, #tpu.memory_space<vmem>>, vector<8x128xf32>,
    } else {
    }
    return
  }
  func.func @transform_0(%arg0: i32, %arg1: i32) -> (i32, i32) {
    %c0_i32 = arith.constant 0 : i32
    %c0_i32_0 = arith.constant 0 : i32
    return %arg0, %c0_i32 : i32, i32
  }
  func.func @transform_1(%arg0: i32, %arg1: i32) -> (i32, i32) {
    %c0_i32 = arith.constant 0 : i32
    %c0_i32_0 = arith.constant 0 : i32
    return %c0_i32, %arg1 : i32, i32
  }
  func.func @transform_2(%arg0: i32, %arg1: i32) -> (i32, i32) {
    %c0_i32 = arith.constant 0 : i32
    %c0_i32_0 = arith.constant 0 : i32
    return %c0_i32, %arg1 : i32, i32
  }
  func.func @transform_3(%arg0: i32, %arg1: i32) -> (i32, i32) {
    %c0_i32 = arith.constant 0 : i32
    %c0_i32_0 = arith.constant 0 : i32
    return %arg1, %c0_i32 : i32, i32
  }
  func.func @transform_4(%arg0: i32, %arg1: i32) -> (i32, i32) {
    %c0_i32 = arith.constant 0 : i32
    %c0_i32_0 = arith.constant 0 : i32
    %c0_i32_1 = arith.constant 0 : i32
    return %c0_i32, %c0_i32_0 : i32, i32
  }
  func.func @transform_5(%arg0: i32, %arg1: i32) -> (i32, i32) {
    %c0_i32 = arith.constant 0 : i32
    %c0_i32_0 = arith.constant 0 : i32
    return %arg0, %c0_i32 : i32, i32
  }
}

</mosaic_0001>

<llo_original>
// kernel: tpu_custom_call.1
$region0: #{tpu_custom_call.1}
  #allocation0 [shape = 'u32[]', space=smem, size = 0x4, offset = 0x4, fixed_abs, tag = 'smem constant byte address 0x4 - core index']
  #allocation1 [shape = 'u32[144,128]{1,0:T(1,128)}', space=vmem, size = 0x12000, scoped, tag = 'internal scratch']
  #allocation2 [shape = 'f32[8,128]{1,0:T(8,128)}', space=vmem, size = 0x1000, scoped, tag = 'scratch operand']
  %s0 = inlined_call_operand.hbm [shape: f32[8,16], index: 0, kind: input, shape index: {}]
  %s1 = inlined_call_operand.hbm [shape: bf16[16,128], index: 1, kind: input, shape index: {}]
  %s2 = inlined_call_operand.vmem [shape: f32[1,128], index: 2, kind: input, shape index: {}]
  %s3 = inlined_call_operand.hbm [shape: bf16[128,128], index: 3, kind: input, shape index: {}]
  %s4 = inlined_call_operand.vmem [shape: f32[1,128], index: 4, kind: input, shape index: {}]
  %s5 = inlined_call_operand.hbm [shape: f32[8,128], index: 5, kind: output, shape index: {}]
  %s6 = sld [smem:[#allocation0]]
  $region50: #{tpu_custom_call.1} parent=0
    _
  %s8 = ssub.s32 1, %s6
  %s9 = scalar_select 0, %s8, %s6
  $region1: #{tpu_custom_call.1} parent=0
    #allocation3 [shape = 'u8[4096]{0}', space=vmem, size = 0x1000, scoped, tag = 'input window, operand 0, single buffered']
    #allocation4 [shape = 's32[1]{0}', space=sflag, size = 0x4, scoped, tag = 'scoped memory for tpu_custom_call.1']
    #allocation5 [shape = 's32[1]{0}', space=sflag, size = 0x4, scoped, tag = 'scoped memory for tpu_custom_call.1']
    #allocation6 [shape = 'u8[4096]{0}', space=vmem, size = 0x1000, scoped, tag = 'input window, operand 1, single buffered']
    #allocation7 [shape = 's32[1]{0}', space=sflag, size = 0x4, scoped, tag = 'scoped memory for tpu_custom_call.1']
    #allocation8 [shape = 'u8[32768]{0}', space=vmem, size = 0x8000, scoped, tag = 'input window, operand 3, single buffered']
    #allocation9 [shape = 'u8[4096]{0}', space=vmem, size = 0x1000, scoped, tag = 'output window, operand 0, single buffered']
    %10 = vsyncpa [#allocation4], 0
    %11 = vsyncpa [#allocation7], 0
    %12 = vsyncpa [#allocation5], 0
    // Predicated region
    $region2: #{tpu_custom_call.1} parent=1 // pred_check
      _
    $region3: #{tpu_custom_call.1} parent=1 // pred_check_branch
      %14 = sbr.rel (0) target = $region5
    $region4: #{tpu_custom_call.1} parent=1 // pred_region
      %s16 = ssub.s32 128, 128
      %17 = vsyncadd [#allocation4], %s16
      %s19 = sshll.u32 [#allocation3], 4
      %s20 = int_to_ptr.vmem [resolvable:$true] %s19
      %22 = dma.hbm_to_vmem [thread:$0]  %s0, 128, %s20, [#allocation4]
    $region5: #{tpu_custom_call.1} parent=1 // pred_fallthru
      _
    // Predicated region
    $region6: #{tpu_custom_call.1} parent=1 // pred_check
      _
    $region7: #{tpu_custom_call.1} parent=1 // pred_check_branch
      %24 = sbr.rel (0) target = $region9
    $region8: #{tpu_custom_call.1} parent=1 // pred_region
      %s26 = ssub.s32 128, 128
      %27 = vsyncadd [#allocation7], %s26
      %s28 = sshll.u32 [#allocation6], 4
      %s29 = int_to_ptr.vmem [resolvable:$true] %s28
      %34 = dma.hbm_to_vmem [thread:$0]  %s1, 128, %s29, [#allocation7], 64, 64, 4
    $region9: #{tpu_custom_call.1} parent=1 // pred_fallthru
      _
    // Predicated region
    $region10: #{tpu_custom_call.1} parent=1 // pred_check
      _
    $region11: #{tpu_custom_call.1} parent=1 // pred_check_branch
      %36 = sbr.rel (0) target = $region13
    $region12: #{tpu_custom_call.1} parent=1 // pred_region
      _
    $region13: #{tpu_custom_call.1} parent=1 // pred_fallthru
      _
    // Predicated region
    $region14: #{tpu_custom_call.1} parent=1 // pred_check
      _
    $region15: #{tpu_custom_call.1} parent=1 // pred_check_branch
      %38 = sbr.rel (0) target = $region17
    $region16: #{tpu_custom_call.1} parent=1 // pred_region
      %s40 = ssub.s32 1024, 1024
      %41 = vsyncadd [#allocation7], %s40
      %s42 = sshll.u32 [#allocation8], 4
      %s43 = int_to_ptr.vmem [resolvable:$true] %s42
      %48 = dma.hbm_to_vmem [thread:$0]  %s3, 1024, %s43, [#allocation7], 64, 64, 4
    $region17: #{tpu_custom_call.1} parent=1 // pred_fallthru
      _
    // Predicated region
    $region18: #{tpu_custom_call.1} parent=1 // pred_check
      _
    $region19: #{tpu_custom_call.1} parent=1 // pred_check_branch
      %50 = sbr.rel (0) target = $region21
    $region20: #{tpu_custom_call.1} parent=1 // pred_region
      _
    $region21: #{tpu_custom_call.1} parent=1 // pred_fallthru
      _
    // Predicated region
    $region22: #{tpu_custom_call.1} parent=1 // pred_check
      _
    $region23: #{tpu_custom_call.1} parent=1 // pred_check_branch
      %52 = sbr.rel (0) target = $region25
    $region24: #{tpu_custom_call.1} parent=1 // pred_region
      %53 = dma.done [#allocation4], 128
    $region25: #{tpu_custom_call.1} parent=1 // pred_fallthru
      _
    // Predicated region
    $region26: #{tpu_custom_call.1} parent=1 // pred_check
      _
    $region27: #{tpu_custom_call.1} parent=1 // pred_check_branch
      %55 = sbr.rel (0) target = $region29
    $region28: #{tpu_custom_call.1} parent=1 // pred_region
      %56 = dma.done [#allocation7], 128
    $region29: #{tpu_custom_call.1} parent=1 // pred_fallthru
      _
    // Predicated region
    $region30: #{tpu_custom_call.1} parent=1 // pred_check
      _
    $region31: #{tpu_custom_call.1} parent=1 // pred_check_branch
      %58 = sbr.rel (0) target = $region33
    $region32: #{tpu_custom_call.1} parent=1 // pred_region
      %59 = dma.done [#allocation7], 1024
    $region33: #{tpu_custom_call.1} parent=1 // pred_fallthru
      _
    %p61 = scmp.eq.s32.totalorder 0, 0
    // Predicated region
    $region34: #{tpu_custom_call.1} parent=1 // pred_check
      %p62 = pneg %p61
    $region35: #{tpu_custom_call.1} parent=1 // pred_check_branch
      %64 = sbr.rel (%p62) target = $region37
    $region36: #{tpu_custom_call.1} parent=1 // pred_region
      %65 = vst [vmem:[#allocation2] sm:$0xff] 0.0
    $region37: #{tpu_custom_call.1} parent=1 // pred_fallthru
      _
    %v66 = vld [vmem:[#allocation3] sm:$0xff]
    %v67 = vpack.c.bf16 %v66, %v66
    %v68 = vld [vmem:[#allocation6] sm:$0xf]
    %v69 = vld [vmem:[#allocation6 + $0x4] sm:$0xf]
    %v70 = vld [vmem:[%s2] sm:$0x1]
    %v72 = vlaneseq
    %v73 = vshrl.u32 %v72, 7
    %v74 = vsub.s32 0, %v73
    %v75 = vrot.slane %v70, %v74
    %v79 = vunpack.c.l.b16 %v68
    %v80 = vunpack.c.l.b16 %v69
    %v81 = vpack.c.b16 %v80, %v79
    %vm83 = vcmask 130048
    %v85 = vsel %vm83, %v67, 0
    %87 = vmatprep.subr.bf16.mxu0 0
    %88 = vmatpush1.bf16.msra.mxu0 %v81
    %89 = vmatprep.subr.bf16.mxu0 0
    %90 = vmatpush1.bf16.msra.mxu0 0
    %91 = vmatprep.subr.bf16.mxu0 0
    %92 = vmatpush1.bf16.msra.mxu0 0
    %93 = vmatprep.subr.bf16.mxu0 0
    %94 = vmatpush1.bf16.msra.mxu0 0
    %95 = vmatprep.subr.bf16.mxu0 0
    %96 = vmatpush1.bf16.msra.mxu0 0
    %97 = vmatprep.subr.bf16.mxu0 0
    %98 = vmatpush1.bf16.msra.mxu0 0
    %99 = vmatprep.subr.bf16.mxu0 0
    %100 = vmatpush1.bf16.msra.mxu0 0
    %101 = vmatprep.subr.bf16.mxu0 0
    %102 = vmatpush1.bf16.msra.mxu0 0
    %103 = vmatprep.subr.bf16.mxu0 0
    %104 = vmatpush1.bf16.msra.mxu0 0
    %105 = vmatprep.subr.bf16.mxu0 0
    %106 = vmatpush1.bf16.msra.mxu0 0
    %107 = vmatprep.subr.bf16.mxu0 0
    %108 = vmatpush1.bf16.msra.mxu0 0
    %109 = vmatprep.subr.bf16.mxu0 0
    %110 = vmatpush1.bf16.msra.mxu0 0
    %111 = vmatprep.subr.bf16.mxu0 0
    %112 = vmatpush1.bf16.msra.mxu0 0
    %113 = vmatprep.subr.bf16.mxu0 0
    %114 = vmatpush1.bf16.msra.mxu0 0
    %115 = vmatprep.subr.bf16.mxu0 0
    %116 = vmatpush1.bf16.msra.mxu0 0
    %117 = vmatprep.subr.bf16.mxu0 0
    %118 = vmatpush1.bf16.msra.mxu0 0
    %119 = vmatprep.mubr.bf16.mxu0 0
    %120 = vmatmul.mubr.bf16.gmra.mrb[0].mxu0 %v85
    %v121 = vpop.f32.mrb[0].mxu0
    %v122 = vadd.f32 %v75, %v121
    %v123 = vpop.f32.mrb[0].mxu0
    %v124 = vpop.f32.mrb[0].mxu0
    %v125 = vpop.f32.mrb[0].mxu0
    %126 = vdwg.mxu0
    %v127 = vmax.f32 %v122, 0.0
    %v128 = vld [vmem:[#allocation2] sm:$0xff]
    %v129 = vpack.c.bf16 %v127, %v127
    %v130 = vld [vmem:[#allocation8] sm:$0xf]
    %v131 = vld [vmem:[#allocation8 + $0x4] sm:$0xf]
    %v132 = vld [vmem:[#allocation8 + $0x8] sm:$0xf]
    %v133 = vld [vmem:[#allocation8 + $0xc] sm:$0xf]
    %v134 = vld [vmem:[#allocation8 + $0x10] sm:$0xf]
    %v135 = vld [vmem:[#allocation8 + $0x14] sm:$0xf]
    %v136 = vld [vmem:[#allocation8 + $0x18] sm:$0xf]
    %v137 = vld [vmem:[#allocation8 + $0x1c] sm:$0xf]
    %v138 = vld [vmem:[#allocation8 + $0x20] sm:$0xf]
    %v139 = vld [vmem:[#allocation8 + $0x24] sm:$0xf]
    %v140 = vld [vmem:[#allocation8 + $0x28] sm:$0xf]
    %v141 = vld [vmem:[#allocation8 + $0x2c] sm:$0xf]
    %v142 = vld [vmem:[#allocation8 + $0x30] sm:$0xf]
    %v143 = vld [vmem:[#allocation8 + $0x34] sm:$0xf]
    %v144 = vld [vmem:[#allocation8 + $0x38] sm:$0xf]
    %v145 = vld [vmem:[#allocation8 + $0x3c] sm:$0xf]
    %v162 = vunpack.c.l.b16 %v130
    %v163 = vunpack.c.l.b16 %v131
    %v164 = vunpack.c.l.b16 %v132
    %v165 = vunpack.c.l.b16 %v133
    %v166 = vunpack.c.l.b16 %v134
    %v167 = vunpack.c.l.b16 %v135
    %v168 = vunpack.c.l.b16 %v136
    %v169 = vunpack.c.l.b16 %v137
    %v170 = vunpack.c.l.b16 %v138
    %v171 = vunpack.c.l.b16 %v139
    %v172 = vunpack.c.l.b16 %v140
    %v173 = vunpack.c.l.b16 %v141
    %v174 = vunpack.c.l.b16 %v142
    %v175 = vunpack.c.l.b16 %v143
    %v176 = vunpack.c.l.b16 %v144
    %v177 = vunpack.c.l.b16 %v145
    %v178 = vpack.c.b16 %v163, %v162
    %v179 = vpack.c.b16 %v165, %v164
    %v180 = vpack.c.b16 %v167, %v166
    %v181 = vpack.c.b16 %v169, %v168
    %v182 = vpack.c.b16 %v171, %v170
    %v183 = vpack.c.b16 %v173, %v172
    %v184 = vpack.c.b16 %v175, %v174
    %v185 = vpack.c.b16 %v177, %v176
    %194 = vmatprep.subr.bf16.mxu0 0
    %195 = vmatpush1.bf16.msra.mxu0 %v178
    %196 = vmatprep.subr.bf16.mxu0 0
    %197 = vmatpush1.bf16.msra.mxu0 %v179
    %198 = vmatprep.subr.bf16.mxu0 0
    %199 = vmatpush1.bf16.msra.mxu0 %v180
    %200 = vmatprep.subr.bf16.mxu0 0
    %201 = vmatpush1.bf16.msra.mxu0 %v181
    %202 = vmatprep.subr.bf16.mxu0 0
    %203 = vmatpush1.bf16.msra.mxu0 %v182
    %204 = vmatprep.subr.bf16.mxu0 0
    %205 = vmatpush1.bf16.msra.mxu0 %v183
    %206 = vmatprep.subr.bf16.mxu0 0
    %207 = vmatpush1.bf16.msra.mxu0 %v184
    %208 = vmatprep.subr.bf16.mxu0 0
    %209 = vmatpush1.bf16.msra.mxu0 %v185
    %210 = vmatprep.subr.bf16.mxu0 0
    %211 = vmatpush1.bf16.msra.mxu0 0
    %212 = vmatprep.subr.bf16.mxu0 0
    %213 = vmatpush1.bf16.msra.mxu0 0
    %214 = vmatprep.subr.bf16.mxu0 0
    %215 = vmatpush1.bf16.msra.mxu0 0
    %216 = vmatprep.subr.bf16.mxu0 0
    %217 = vmatpush1.bf16.msra.mxu0 0
    %218 = vmatprep.subr.bf16.mxu0 0
    %219 = vmatpush1.bf16.msra.mxu0 0
    %220 = vmatprep.subr.bf16.mxu0 0
    %221 = vmatpush1.bf16.msra.mxu0 0
    %222 = vmatprep.subr.bf16.mxu0 0
    %223 = vmatpush1.bf16.msra.mxu0 0
    %224 = vmatprep.subr.bf16.mxu0 0
    %225 = vmatpush1.bf16.msra.mxu0 0
    %226 = vmatprep.mubr.bf16.mxu0 0
    %227 = vmatmul.mubr.bf16.gmra.mrb[0].mxu0 %v129
    %v228 = vpop.f32.mrb[0].mxu0
    %v229 = vadd.f32 0.0, %v228
    %v230 = vpop.f32.mrb[0].mxu0
    %v231 = vpop.f32.mrb[0].mxu0
    %v232 = vpop.f32.mrb[0].mxu0
    %233 = vdwg.mxu0
    %v234 = vadd.f32 %v128, %v229
    %235 = vst [vmem:[#allocation2] sm:$0xff] %v234
    // Predicated region
    $region38: #{tpu_custom_call.1} parent=1 // pred_check
      %p236 = pneg %p61
    $region39: #{tpu_custom_call.1} parent=1 // pred_check_branch
      %238 = sbr.rel (%p236) target = $region41
    $region40: #{tpu_custom_call.1} parent=1 // pred_region
      %v239 = vld [vmem:[#allocation2] sm:$0xff]
      %v240 = vld [vmem:[%s4] sm:$0x1]
      %v242 = vlaneseq
      %v243 = vshrl.u32 %v242, 7
      %v244 = vsub.s32 0, %v243
      %v245 = vrot.slane %v240, %v244
      %v247 = vadd.f32 %v239, %v245
      %248 = vst [vmem:[#allocation9] sm:$0xff] %v247
    $region41: #{tpu_custom_call.1} parent=1 // pred_fallthru
      _
    // Predicated region
    $region42: #{tpu_custom_call.1} parent=1 // pred_check
      _
    $region43: #{tpu_custom_call.1} parent=1 // pred_check_branch
      %250 = sbr.rel (0) target = $region45
    $region44: #{tpu_custom_call.1} parent=1 // pred_region
      %s252 = ssub.s32 128, 128
      %253 = vsyncadd [#allocation5], %s252
      %s255 = sshll.u32 [#allocation9], 4
      %s256 = int_to_ptr.vmem [resolvable:$true] %s255
      %258 = dma.vmem_to_hbm [thread:$0]  %s256, 128, %s5, [#allocation5]
    $region45: #{tpu_custom_call.1} parent=1 // pred_fallthru
      _
    // Predicated region
    $region46: #{tpu_custom_call.1} parent=1 // pred_check
      _
    $region47: #{tpu_custom_call.1} parent=1 // pred_check_branch
      %260 = sbr.rel (0) target = $region49
    $region48: #{tpu_custom_call.1} parent=1 // pred_region
      %261 = dma.done [#allocation5], 128
    $region49: #{tpu_custom_call.1} parent=1 // pred_fallthru
      _
    %262 = vsyncpa [#allocation4], 1
    %263 = vsyncpa [#allocation7], 1
    %264 = vsyncpa [#allocation5], 1

</llo_original>
